<compile_context>
chip_gen: v6e
topology: v6e:2x2x1
jax: 0.10.0
libtpu: 0.0.40
codegen_flags: <defaults>
</compile_context>

<pallas_src>
import functools

import jax
import jax.numpy as jnp
from jax.experimental import pallas as pl
from jax.experimental.pallas import tpu as pltpu


def _round_up(n, m):
    return ((n + m - 1) // m) * m


def _vmem_capacity_bytes(default=64 * 1024 * 1024):
    """Physical VMEM per TensorCore (64 MiB on v7x, 128 MiB on v5e/v6e)."""
    try:
        return int(pltpu.get_tpu_info().vmem_capacity_bytes)
    except Exception:
        return default


def _choose_row_tile(rows, d, tn, x_itemsize, out_itemsize, w_itemsize,
                     budget_bytes, max_rows_per_tile):
    """Row tile: multiple of 8, sized so the *real* VMEM footprint fits."""
    # Resident (constant-index, single-buffered) folded weight + bias.
    resident = d * tn * w_itemsize + tn * 4
    # Per-row bytes: double-buffered x and out tiles plus the f32 temporaries
    # the kernel body actually materialises (x/centered/xn in f32 and the f32
    # matmul accumulator before the down-cast store).
    per_row = (2 * d * x_itemsize        # x, double buffered
               + 2 * tn * out_itemsize   # out, double buffered
               + 2 * d * 4               # f32 centered / normalized copies
               + tn * 4)                 # f32 accumulator
    avail = budget_bytes - resident
    tr = avail // per_row if avail > 0 else 8
    tr = min(int(tr), int(max_rows_per_tile), _round_up(rows, 8))
    tr = max(8, (tr // 8) * 8)
    return tr


def _prenorm_linear_kernel(x_ref, w_ref, b_ref, o_ref, *, eps):
    # x_ref: (TR, D) row block.  w_ref: (D, TN) folded-weight block (resident
    # when the feature dim is untiled).  b_ref: (1, TN).  o_ref: (TR, TN).
    x = x_ref[...].astype(jnp.float32)

    # LayerNorm over the last axis (biased variance, eps inside rsqrt) --
    # matches torch.nn.LayerNorm.  The gamma/beta affine is folded into w/b.
    mean = jnp.mean(x, axis=-1, keepdims=True)
    centered = x - mean
    var = jnp.mean(centered * centered, axis=-1, keepdims=True)
    xn = centered * jax.lax.rsqrt(var + eps)

    # fn(x): Linear on the MXU in the weight's native precision, f32 accum.
    out = jnp.dot(xn.astype(w_ref.dtype), w_ref[...],
                  preferred_element_type=jnp.float32)
    o_ref[...] = (out + b_ref[...].astype(jnp.float32)).astype(o_ref.dtype)
    # TODO(synk): for very large D (>=1024) chunk the row tile with an
    # unrolled lax.fori_loop to bound f32 live ranges (vreg-spill avoidance).


def prenorm_linear(x, gamma, beta, w, wb, *, eps=1e-5,
                   max_rows_per_tile=4096, feature_tile=512, mxu_dtype=None):
    """x: (B, S, D) -> (B, S, H).  LayerNorm(D) then Linear(D, H), fused."""
    B, S, D = x.shape
    H = w.shape[1]
    R = B * S

    # Fold the LayerNorm affine into the linear (exact up to fp rounding):
    #   (xn*gamma + beta) @ W + wb == xn @ (gamma[:, None]*W) + (beta @ W + wb)
    w32 = w.astype(jnp.float32)
    w_folded = gamma.astype(jnp.float32)[:, None] * w32
    b_folded = (beta.astype(jnp.float32) @ w32 + wb.astype(jnp.float32)).reshape(1, H)
    w_folded = w_folded.astype(mxu_dtype if mxu_dtype is not None else w.dtype)

    # Feature (N) tiling: only when H is wide enough to matter; otherwise a
    # single full-width block (block last-dim == full dim is legal for any H,
    # so narrow H needs no 128-padding and no post-kernel slice copy).
    if H >= 2 * feature_tile and H % feature_tile == 0:
        TN = feature_tile
    else:
        TN = H
    num_n = H // TN

    # Generation-aware VMEM budget: ~45% of physical capacity for the tiles,
    # vmem_limit_bytes at ~70% so the compiler keeps scratch/spill headroom
    # (v7x: ~29/45 MiB of 64; v5e/v6e: ~57/89 MiB of 128).
    vmem_cap = _vmem_capacity_bytes()
    budget = int(0.45 * vmem_cap)
    vmem_limit = int(0.70 * vmem_cap)

    TR = _choose_row_tile(
        R, D, TN,
        x_itemsize=jnp.dtype(x.dtype).itemsize,
        out_itemsize=jnp.dtype(x.dtype).itemsize,
        w_itemsize=jnp.dtype(w_folded.dtype).itemsize,
        budget_bytes=budget, max_rows_per_tile=max_rows_per_tile)

    x2d = x.reshape(R, D)           # free reshape, no HBM copy
    grid = (pl.cdiv(R, TR), num_n)  # ragged final row block handled by Pallas
    kernel = functools.partial(_prenorm_linear_kernel, eps=eps)

    def build(single_buffer_resident):
        resident_kw = {}
        if single_buffer_resident:
            # Constant-index operands are fetched once; a second buffer is
            # wasted VMEM (biggest win on v7x's 64 MiB per TC).
            resident_kw = dict(pipeline_mode=pl.Buffered(1))
        return pl.pallas_call(
            kernel,
            out_shape=jax.ShapeDtypeStruct((R, H), x.dtype),
            grid_spec=pltpu.PrefetchScalarGridSpec(
                num_scalar_prefetch=0,
                grid=grid,
                in_specs=[
                    pl.BlockSpec((TR, D), lambda i, j: (i, 0)),            # streamed rows
                    pl.BlockSpec((D, TN), lambda i, j: (0, j), **resident_kw),  # folded W
                    pl.BlockSpec((1, TN), lambda i, j: (0, j), **resident_kw),  # folded b
                ],
                out_specs=pl.BlockSpec((TR, TN), lambda i, j: (i, j)),
            ),
            compiler_params=pltpu.CompilerParams(
                # TODO(synk): verify on v7x that "parallel" shards the row axis
                # across both TensorCores; if not, switch to pltpu.CORE_PARALLEL.
                dimension_semantics=("parallel", "parallel"),
                vmem_limit_bytes=vmem_limit,
            ),
        )

    # Single-buffer the weight/bias only when they are truly resident (feature
    # dim untiled).  Fall back to default double buffering if this JAX build
    # does not plumb pipeline_mode through top-level pallas_call.
    try:
        out2d = build(single_buffer_resident=(num_n == 1))(x2d, w_folded, b_folded)
    except Exception:
        out2d = build(single_buffer_resident=False)(x2d, w_folded, b_folded)

    return out2d.reshape(B, S, H)


def _reference(x, gamma, beta, w, wb, eps=1e-5):
    xf = x.astype(jnp.float32)
    mean = jnp.mean(xf, axis=-1, keepdims=True)
    var = jnp.mean((xf - mean) ** 2, axis=-1, keepdims=True)
    xn = (xf - mean) / jnp.sqrt(var + eps)
    y = xn * gamma + beta
    return (y @ w + wb).astype(x.dtype)


if __name__ == "__main__":
    key = jax.random.PRNGKey(0)
    # batch=2, seq=100, LayerNorm dim=32, fn = Linear(32 -> 32).
    B, S, D, H = 2, 100, 32, 32

    k_x, k_g, k_b, k_w, k_wb = jax.random.split(key, 5)
    x = jax.random.normal(k_x, (B, S, D), dtype=jnp.float32)
    # nn.LayerNorm default init is gamma=1, beta=0; perturb deterministically
    # so the (folded) affine path is exercised.
    gamma = 1.0 + 0.1 * jax.random.normal(k_g, (D,), dtype=jnp.float32)
    beta = 0.1 * jax.random.normal(k_b, (D,), dtype=jnp.float32)
    # fn = Linear(D, H), deterministic synthetic weights.
    w = jax.random.normal(k_w, (D, H), dtype=jnp.float32) / jnp.sqrt(D)
    wb = 0.01 * jax.random.normal(k_wb, (H,), dtype=jnp.float32)

    ref = _reference(x, gamma, beta, w, wb)

    # Default config: the budgeted row tile covers all 200 rows in one step.
    out = jax.block_until_ready(prenorm_linear(x, gamma, beta, w, wb))
    assert out.shape == (B, S, H)
    assert jnp.allclose(out, ref, atol=1e-4, rtol=1e-4), "mismatch (default tiling)"

    # Small row-tile cap: exercises the multi-step row grid *and* the ragged
    # final block (200 = 4*48 + 8) that Pallas handles with masked edge DMA.
    out_tiled = jax.block_until_ready(
        prenorm_linear(x, gamma, beta, w, wb, max_rows_per_tile=48))
    assert jnp.allclose(out_tiled, ref, atol=1e-4, rtol=1e-4), "mismatch (48-row tiles)"

    print("KERNEL_OK")
</pallas_src>

<mosaic_0001>
module attributes {stable_mosaic.version = 11 : i64} {
  func.func @_prenorm_linear_kernel(%arg0: i32, %arg1: i32, %arg2: memref<200x32xf32, #tpu.memory_space<vmem>>, %arg3: memref<32x32xf32, #tpu.memory_space<vmem>>, %arg4: memref<1x32xf32, #tpu.memory_space<vmem>>, %arg5: memref<200x32xf32, #tpu.memory_space<vmem>>) attributes {dimension_semantics = [#tpu.dimension_semantics<parallel>, #tpu.dimension_semantics<parallel>], iteration_bounds = array<i64: 1, 1>, scalar_prefetch = 0 : i64, scratch_operands = 0 : i64, tpu.core_type = #tpu.core_type<tc>, window_params = [{transform_indices = @transform_0, window_bounds = array<i64: 200, 32>}, {pipeline_mode = #tpu.pipeline_mode<synchronous>, transform_indices = @transform_1, window_bounds = array<i64: 32, 32>}, {pipeline_mode = #tpu.pipeline_mode<synchronous>, transform_indices = @transform_2, window_bounds = array<i64: 1, 32>}, {transform_indices = @transform_3, window_bounds = array<i64: 200, 32>}]} {
    %c0 = arith.constant 0 : index
    %c0_0 = arith.constant 0 : index
    %0 = vector.load %arg2[%c0, %c0_0] : memref<200x32xf32, #tpu.memory_space<vmem>>, vector<200x32xf32>
    %cst = arith.constant dense<0.000000e+00> : vector<200xf32>
    %1 = vector.multi_reduction <add>, %0, %cst [1] : vector<200x32xf32> to vector<200xf32>
    %2 = vector.shape_cast %1 : vector<200xf32> to vector<200x1xf32>
    %cst_1 = arith.constant 3.200000e+01 : f32
    %3 = vector.broadcast %cst_1 : f32 to vector<200x1xf32>
    %4 = arith.divf %2, %3 : vector<200x1xf32>
    %5 = vector.broadcast %4 : vector<200x1xf32> to vector<200x32xf32>
    %6 = arith.subf %0, %5 : vector<200x32xf32>
    %7 = arith.mulf %6, %6 : vector<200x32xf32>
    %cst_2 = arith.constant dense<0.000000e+00> : vector<200xf32>
    %8 = vector.multi_reduction <add>, %7, %cst_2 [1] : vector<200x32xf32> to vector<200xf32>
    %9 = vector.shape_cast %8 : vector<200xf32> to vector<200x1xf32>
    %cst_3 = arith.constant 3.200000e+01 : f32
    %10 = vector.broadcast %cst_3 : f32 to vector<200x1xf32>
    %11 = arith.divf %9, %10 : vector<200x1xf32>
    %cst_4 = arith.constant 9.99999974E-6 : f32
    %12 = vector.broadcast %cst_4 : f32 to vector<200x1xf32>
    %13 = arith.addf %11, %12 : vector<200x1xf32>
    %14 = math.rsqrt %13 : vector<200x1xf32>
    %15 = vector.broadcast %14 : vector<200x1xf32> to vector<200x32xf32>
    %16 = arith.mulf %6, %15 : vector<200x32xf32>
    %c0_5 = arith.constant 0 : index
    %c0_6 = arith.constant 0 : index
    %17 = vector.load %arg3[%c0_5, %c0_6] : memref<32x32xf32, #tpu.memory_space<vmem>>, vector<32x32xf32>
    %cst_7 = arith.constant dense<0.000000e+00> : vector<200x32xf32>
    %18 = tpu.matmul %16, %17, %cst_7 {dimension_numbers = #tpu.dot_dimension_numbers<[1], [0], [0], [1], [0, 0, 1, 1], [], []>} : vector<200x32xf32>, vector<32x32xf32>, vector<200x32xf32> -> vector<200x32xf32>
    %c0_8 = arith.constant 0 : index
    %c0_9 = arith.constant 0 : index
    %19 = vector.load %arg4[%c0_8, %c0_9] : memref<1x32xf32, #tpu.memory_space<vmem>>, vector<1x32xf32>
    %20 = vector.broadcast %19 : vector<1x32xf32> to vector<200x32xf32>
    %21 = arith.addf %18, %20 : vector<200x32xf32>
    %c0_10 = arith.constant 0 : index
    %c0_11 = arith.constant 0 : index
    %22 = vector.load %arg5[%c0_10, %c0_11] : memref<200x32xf32, #tpu.memory_space<vmem>>, vector<200x32xf32>
    tpu.vector_store %arg5[%c0_10, %c0_11], %21 {strides = array<i32>} : memref<200x32xf32, #tpu.memory_space<vmem>>, vector<200x32xf32>,
    return
  }
  func.func @transform_0(%arg0: i32, %arg1: i32) -> (i32, i32) {
    %c0_i32 = arith.constant 0 : i32
    %c0_i32_0 = arith.constant 0 : i32
    return %arg0, %c0_i32 : i32, i32
  }
  func.func @transform_1(%arg0: i32, %arg1: i32) -> (i32, i32) {
    %c0_i32 = arith.constant 0 : i32
    %c0_i32_0 = arith.constant 0 : i32
    return %c0_i32, %arg1 : i32, i32
  }
  func.func @transform_2(%arg0: i32, %arg1: i32) -> (i32, i32) {
    %c0_i32 = arith.constant 0 : i32
    %c0_i32_0 = arith.constant 0 : i32
    return %c0_i32, %arg1 : i32, i32
  }
  func.func @transform_3(%arg0: i32, %arg1: i32) -> (i32, i32) {
    %c0_i32 = arith.constant 0 : i32
    return %arg0, %arg1 : i32, i32
  }
}

module attributes {stable_mosaic.version = 11 : i64} {
  func.func @_prenorm_linear_kernel(%arg0: i32, %arg1: i32, %arg2: memref<200x32xf32, #tpu.memory_space<vmem>>, %arg3: memref<32x32xf32, #tpu.memory_space<vmem>>, %arg4: memref<1x32xf32, #tpu.memory_space<vmem>>, %arg5: memref<200x32xf32, #tpu.memory_space<vmem>>) attributes {dimension_semantics = [#tpu.dimension_semantics<parallel>, #tpu.dimension_semantics<parallel>], iteration_bounds = array<i64: 1, 1>, scalar_prefetch = 0 : i64, scratch_operands = 0 : i64, tpu.core_type = #tpu.core_type<tc>, window_params = [{transform_indices = @transform_0, window_bounds = array<i64: 200, 32>}, {transform_indices = @transform_1, window_bounds = array<i64: 32, 32>}, {transform_indices = @transform_2, window_bounds = array<i64: 1, 32>}, {transform_indices = @transform_3, window_bounds = array<i64: 200, 32>}]} {
    %c0 = arith.constant 0 : index
    %c0_0 = arith.constant 0 : index
    %0 = vector.load %arg2[%c0, %c0_0] : memref<200x32xf32, #tpu.memory_space<vmem>>, vector<200x32xf32>
    %cst = arith.constant dense<0.000000e+00> : vector<200xf32>
    %1 = vector.multi_reduction <add>, %0, %cst [1] : vector<200x32xf32> to vector<200xf32>
    %2 = vector.shape_cast %1 : vector<200xf32> to vector<200x1xf32>
    %cst_1 = arith.constant 3.200000e+01 : f32
    %3 = vector.broadcast %cst_1 : f32 to vector<200x1xf32>
    %4 = arith.divf %2, %3 : vector<200x1xf32>
    %5 = vector.broadcast %4 : vector<200x1xf32> to vector<200x32xf32>
    %6 = arith.subf %0, %5 : vector<200x32xf32>
    %7 = arith.mulf %6, %6 : vector<200x32xf32>
    %cst_2 = arith.constant dense<0.000000e+00> : vector<200xf32>
    %8 = vector.multi_reduction <add>, %7, %cst_2 [1] : vector<200x32xf32> to vector<200xf32>
    %9 = vector.shape_cast %8 : vector<200xf32> to vector<200x1xf32>
    %cst_3 = arith.constant 3.200000e+01 : f32
    %10 = vector.broadcast %cst_3 : f32 to vector<200x1xf32>
    %11 = arith.divf %9, %10 : vector<200x1xf32>
    %cst_4 = arith.constant 9.99999974E-6 : f32
    %12 = vector.broadcast %cst_4 : f32 to vector<200x1xf32>
    %13 = arith.addf %11, %12 : vector<200x1xf32>
    %14 = math.rsqrt %13 : vector<200x1xf32>
    %15 = vector.broadcast %14 : vector<200x1xf32> to vector<200x32xf32>
    %16 = arith.mulf %6, %15 : vector<200x32xf32>
    %c0_5 = arith.constant 0 : index
    %c0_6 = arith.constant 0 : index
    %17 = vector.load %arg3[%c0_5, %c0_6] : memref<32x32xf32, #tpu.memory_space<vmem>>, vector<32x32xf32>
    %cst_7 = arith.constant dense<0.000000e+00> : vector<200x32xf32>
    %18 = tpu.matmul %16, %17, %cst_7 {dimension_numbers = #tpu.dot_dimension_numbers<[1], [0], [0], [1], [0, 0, 1, 1], [], []>} : vector<200x32xf32>, vector<32x32xf32>, vector<200x32xf32> -> vector<200x32xf32>
    %c0_8 = arith.constant 0 : index
    %c0_9 = arith.constant 0 : index
    %19 = vector.load %arg4[%c0_8, %c0_9] : memref<1x32xf32, #tpu.memory_space<vmem>>, vector<1x32xf32>
    %20 = vector.broadcast %19 : vector<1x32xf32> to vector<200x32xf32>
    %21 = arith.addf %18, %20 : vector<200x32xf32>
    %c0_10 = arith.constant 0 : index
    %c0_11 = arith.constant 0 : index
    %22 = vector.load %arg5[%c0_10, %c0_11] : memref<200x32xf32, #tpu.memory_space<vmem>>, vector<200x32xf32>
    tpu.vector_store %arg5[%c0_10, %c0_11], %21 {strides = array<i32>} : memref<200x32xf32, #tpu.memory_space<vmem>>, vector<200x32xf32>,
    return
  }
  func.func @transform_0(%arg0: i32, %arg1: i32) -> (i32, i32) {
    %c0_i32 = arith.constant 0 : i32
    %c0_i32_0 = arith.constant 0 : i32
    return %arg0, %c0_i32 : i32, i32
  }
  func.func @transform_1(%arg0: i32, %arg1: i32) -> (i32, i32) {
    %c0_i32 = arith.constant 0 : i32
    %c0_i32_0 = arith.constant 0 : i32
    return %c0_i32, %arg1 : i32, i32
  }
  func.func @transform_2(%arg0: i32, %arg1: i32) -> (i32, i32) {
    %c0_i32 = arith.constant 0 : i32
    %c0_i32_0 = arith.constant 0 : i32
    return %c0_i32, %arg1 : i32, i32
  }
  func.func @transform_3(%arg0: i32, %arg1: i32) -> (i32, i32) {
    %c0_i32 = arith.constant 0 : i32
    return %arg0, %arg1 : i32, i32
  }
}

</mosaic_0001>

<llo_original>
// kernel: tpu_custom_call.1
$region0: #{tpu_custom_call.1}
  #allocation0 [shape = 'u32[]', space=smem, size = 0x4, offset = 0x4, fixed_abs, tag = 'smem constant byte address 0x4 - core index']
  #allocation1 [shape = 'u32[144,128]{1,0:T(1,128)}', space=vmem, size = 0x12000, scoped, tag = 'internal scratch']
  %s0 = inlined_call_operand.vmem [shape: f32[200,32], index: 0, kind: input, shape index: {}]
  %s1 = inlined_call_operand.vmem [shape: f32[32,32], index: 1, kind: input, shape index: {}]
  %s2 = inlined_call_operand.vmem [shape: f32[1,32], index: 2, kind: input, shape index: {}]
  %s3 = inlined_call_operand.vmem [shape: f32[200,32], index: 3, kind: output, shape index: {}]
  %s4 = sld [smem:[#allocation0]]
  $region22: #{tpu_custom_call.1} parent=0
    _
  %s6 = ssub.s32 1, %s4
  %s7 = scalar_select 0, %s6, %s4
  // Predicated region
  $region2: #{tpu_custom_call.1} parent=0 // pred_check
    _
  $region3: #{tpu_custom_call.1} parent=0 // pred_check_branch
    %9 = sbr.rel (0) target = $region5
  $region4: #{tpu_custom_call.1} parent=0 // pred_region
    _
  $region5: #{tpu_custom_call.1} parent=0 // pred_fallthru
    _
  // Predicated region
  $region6: #{tpu_custom_call.1} parent=0 // pred_check
    _
  $region7: #{tpu_custom_call.1} parent=0 // pred_check_branch
    %11 = sbr.rel (0) target = $region9
  $region8: #{tpu_custom_call.1} parent=0 // pred_region
    _
  $region9: #{tpu_custom_call.1} parent=0 // pred_fallthru
    _
  // Predicated region
  $region10: #{tpu_custom_call.1} parent=0 // pred_check
    _
  $region11: #{tpu_custom_call.1} parent=0 // pred_check_branch
    %13 = sbr.rel (0) target = $region13
  $region12: #{tpu_custom_call.1} parent=0 // pred_region
    _
  $region13: #{tpu_custom_call.1} parent=0 // pred_fallthru
    _
  %v14 = vld [vmem:[%s0] sm:$0xff]
  %v15 = vld [vmem:[%s0 + $0x8] sm:$0xff]
  %v16 = vld [vmem:[%s0 + $0x10] sm:$0xff]
  %v17 = vld [vmem:[%s0 + $0x18] sm:$0xff]
  %v18 = vld [vmem:[%s0 + $0x20] sm:$0xff]
  %v19 = vld [vmem:[%s0 + $0x28] sm:$0xff]
  %v20 = vld [vmem:[%s0 + $0x30] sm:$0xff]
  %v21 = vld [vmem:[%s0 + $0x38] sm:$0xff]
  %v22 = vld [vmem:[%s0 + $0x40] sm:$0xff]
  %v23 = vld [vmem:[%s0 + $0x48] sm:$0xff]
  %v24 = vld [vmem:[%s0 + $0x50] sm:$0xff]
  %v25 = vld [vmem:[%s0 + $0x58] sm:$0xff]
  %v26 = vld [vmem:[%s0 + $0x60] sm:$0xff]
  %v27 = vld [vmem:[%s0 + $0x68] sm:$0xff]
  %v28 = vld [vmem:[%s0 + $0x70] sm:$0xff]
  %v29 = vld [vmem:[%s0 + $0x78] sm:$0xff]
  %v30 = vld [vmem:[%s0 + $0x80] sm:$0xff]
  %v31 = vld [vmem:[%s0 + $0x88] sm:$0xff]
  %v32 = vld [vmem:[%s0 + $0x90] sm:$0xff]
  %v33 = vld [vmem:[%s0 + $0x98] sm:$0xff]
  %v34 = vld [vmem:[%s0 + $0xa0] sm:$0xff]
  %v35 = vld [vmem:[%s0 + $0xa8] sm:$0xff]
  %v36 = vld [vmem:[%s0 + $0xb0] sm:$0xff]
  %v37 = vld [vmem:[%s0 + $0xb8] sm:$0xff]
  %v38 = vld [vmem:[%s0 + $0xc0] sm:$0xff]
  %vm39 = vcmask 261120
  %v40 = vsel %vm39, %v14, 0.0
  %41 = vadd.xlane.f32.xlu0 %v40
  %v42 = vpop.xlane.xlu0 %41
  %v43 = vsel %vm39, %v15, 0.0
  %44 = vadd.xlane.f32.xlu0 %v43
  %v45 = vpop.xlane.xlu0 %44
  %v46 = vsel %vm39, %v16, 0.0
  %47 = vadd.xlane.f32.xlu0 %v46
  %v48 = vpop.xlane.xlu0 %47
  %v49 = vsel %vm39, %v17, 0.0
  %50 = vadd.xlane.f32.xlu0 %v49
  %v51 = vpop.xlane.xlu0 %50
  %v52 = vsel %vm39, %v18, 0.0
  %53 = vadd.xlane.f32.xlu0 %v52
  %v54 = vpop.xlane.xlu0 %53
  %v55 = vsel %vm39, %v19, 0.0
  %56 = vadd.xlane.f32.xlu0 %v55
  %v57 = vpop.xlane.xlu0 %56
  %v58 = vsel %vm39, %v20, 0.0
  %59 = vadd.xlane.f32.xlu0 %v58
  %v60 = vpop.xlane.xlu0 %59
  %v61 = vsel %vm39, %v21, 0.0
  %62 = vadd.xlane.f32.xlu0 %v61
  %v63 = vpop.xlane.xlu0 %62
  %v64 = vsel %vm39, %v22, 0.0
  %65 = vadd.xlane.f32.xlu0 %v64
  %v66 = vpop.xlane.xlu0 %65
  %v67 = vsel %vm39, %v23, 0.0
  %68 = vadd.xlane.f32.xlu0 %v67
  %v69 = vpop.xlane.xlu0 %68
  %v70 = vsel %vm39, %v24, 0.0
  %71 = vadd.xlane.f32.xlu0 %v70
  %v72 = vpop.xlane.xlu0 %71
  %v73 = vsel %vm39, %v25, 0.0
  %74 = vadd.xlane.f32.xlu0 %v73
  %v75 = vpop.xlane.xlu0 %74
  %v76 = vsel %vm39, %v26, 0.0
  %77 = vadd.xlane.f32.xlu0 %v76
  %v78 = vpop.xlane.xlu0 %77
  %v79 = vsel %vm39, %v27, 0.0
  %80 = vadd.xlane.f32.xlu0 %v79
  %v81 = vpop.xlane.xlu0 %80
  %v82 = vsel %vm39, %v28, 0.0
  %83 = vadd.xlane.f32.xlu0 %v82
  %v84 = vpop.xlane.xlu0 %83
  %v85 = vsel %vm39, %v29, 0.0
  %86 = vadd.xlane.f32.xlu0 %v85
  %v87 = vpop.xlane.xlu0 %86
  %v88 = vsel %vm39, %v30, 0.0
  %89 = vadd.xlane.f32.xlu0 %v88
  %v90 = vpop.xlane.xlu0 %89
  %v91 = vsel %vm39, %v31, 0.0
  %92 = vadd.xlane.f32.xlu0 %v91
  %v93 = vpop.xlane.xlu0 %92
  %v94 = vsel %vm39, %v32, 0.0
  %95 = vadd.xlane.f32.xlu0 %v94
  %v96 = vpop.xlane.xlu0 %95
  %v97 = vsel %vm39, %v33, 0.0
  %98 = vadd.xlane.f32.xlu0 %v97
  %v99 = vpop.xlane.xlu0 %98
  %v100 = vsel %vm39, %v34, 0.0
  %101 = vadd.xlane.f32.xlu0 %v100
  %v102 = vpop.xlane.xlu0 %101
  %v103 = vsel %vm39, %v35, 0.0
  %104 = vadd.xlane.f32.xlu0 %v103
  %v105 = vpop.xlane.xlu0 %104
  %v106 = vsel %vm39, %v36, 0.0
  %107 = vadd.xlane.f32.xlu0 %v106
  %v108 = vpop.xlane.xlu0 %107
  %v109 = vsel %vm39, %v37, 0.0
  %110 = vadd.xlane.f32.xlu0 %v109
  %v111 = vpop.xlane.xlu0 %110
  %v112 = vsel %vm39, %v38, 0.0
  %113 = vadd.xlane.f32.xlu0 %v112
  %v114 = vpop.xlane.xlu0 %113
  %v115 = vrcp.pop 32.0
  %v116 = vmul.f32 %v42, %v115
  %v117 = vmul.f32 %v45, %v115
  %v118 = vmul.f32 %v48, %v115
  %v119 = vmul.f32 %v51, %v115
  %v120 = vmul.f32 %v54, %v115
  %v121 = vmul.f32 %v57, %v115
  %v122 = vmul.f32 %v60, %v115
  %v123 = vmul.f32 %v63, %v115
  %v124 = vmul.f32 %v66, %v115
  %v125 = vmul.f32 %v69, %v115
  %v126 = vmul.f32 %v72, %v115
  %v127 = vmul.f32 %v75, %v115
  %v128 = vmul.f32 %v78, %v115
  %v129 = vmul.f32 %v81, %v115
  %v130 = vmul.f32 %v84, %v115
  %v131 = vmul.f32 %v87, %v115
  %v132 = vmul.f32 %v90, %v115
  %v133 = vmul.f32 %v93, %v115
  %v134 = vmul.f32 %v96, %v115
  %v135 = vmul.f32 %v99, %v115
  %v136 = vmul.f32 %v102, %v115
  %v137 = vmul.f32 %v105, %v115
  %v138 = vmul.f32 %v108, %v115
  %v139 = vmul.f32 %v111, %v115
  %v140 = vmul.f32 %v114, %v115
  %v141 = vsub.f32 %v14, %v116
  %v142 = vsub.f32 %v15, %v117
  %v143 = vsub.f32 %v16, %v118
  %v144 = vsub.f32 %v17, %v119
  %v145 = vsub.f32 %v18, %v120
  %v146 = vsub.f32 %v19, %v121
  %v147 = vsub.f32 %v20, %v122
  %v148 = vsub.f32 %v21, %v123
  %v149 = vsub.f32 %v22, %v124
  %v150 = vsub.f32 %v23, %v125
  %v151 = vsub.f32 %v24, %v126
  %v152 = vsub.f32 %v25, %v127
  %v153 = vsub.f32 %v26, %v128
  %v154 = vsub.f32 %v27, %v129
  %v155 = vsub.f32 %v28, %v130
  %v156 = vsub.f32 %v29, %v131
  %v157 = vsub.f32 %v30, %v132
  %v158 = vsub.f32 %v31, %v133
  %v159 = vsub.f32 %v32, %v134
  %v160 = vsub.f32 %v33, %v135
  %v161 = vsub.f32 %v34, %v136
  %v162 = vsub.f32 %v35, %v137
  %v163 = vsub.f32 %v36, %v138
  %v164 = vsub.f32 %v37, %v139
  %v165 = vsub.f32 %v38, %v140
  %v166 = vmul.f32 %v141, %v141
  %v167 = vmul.f32 %v142, %v142
  %v168 = vmul.f32 %v143, %v143
  %v169 = vmul.f32 %v144, %v144
  %v170 = vmul.f32 %v145, %v145
  %v171 = vmul.f32 %v146, %v146
  %v172 = vmul.f32 %v147, %v147
  %v173 = vmul.f32 %v148, %v148
  %v174 = vmul.f32 %v149, %v149
  %v175 = vmul.f32 %v150, %v150
  %v176 = vmul.f32 %v151, %v151
  %v177 = vmul.f32 %v152, %v152
  %v178 = vmul.f32 %v153, %v153
  %v179 = vmul.f32 %v154, %v154
  %v180 = vmul.f32 %v155, %v155
  %v181 = vmul.f32 %v156, %v156
  %v182 = vmul.f32 %v157, %v157
  %v183 = vmul.f32 %v158, %v158
  %v184 = vmul.f32 %v159, %v159
  %v185 = vmul.f32 %v160, %v160
  %v186 = vmul.f32 %v161, %v161
  %v187 = vmul.f32 %v162, %v162
  %v188 = vmul.f32 %v163, %v163
  %v189 = vmul.f32 %v164, %v164
  %v190 = vmul.f32 %v165, %v165
  %v191 = vsel %vm39, %v166, 0.0
  %192 = vadd.xlane.f32.xlu0 %v191
  %v193 = vpop.xlane.xlu0 %192
  %v194 = vsel %vm39, %v167, 0.0
  %195 = vadd.xlane.f32.xlu0 %v194
  %v196 = vpop.xlane.xlu0 %195
  %v197 = vsel %vm39, %v168, 0.0
  %198 = vadd.xlane.f32.xlu0 %v197
  %v199 = vpop.xlane.xlu0 %198
  %v200 = vsel %vm39, %v169, 0.0
  %201 = vadd.xlane.f32.xlu0 %v200
  %v202 = vpop.xlane.xlu0 %201
  %v203 = vsel %vm39, %v170, 0.0
  %204 = vadd.xlane.f32.xlu0 %v203
  %v205 = vpop.xlane.xlu0 %204
  %v206 = vsel %vm39, %v171, 0.0
  %207 = vadd.xlane.f32.xlu0 %v206
  %v208 = vpop.xlane.xlu0 %207
  %v209 = vsel %vm39, %v172, 0.0
  %210 = vadd.xlane.f32.xlu0 %v209
  %v211 = vpop.xlane.xlu0 %210
  %v212 = vsel %vm39, %v173, 0.0
  %213 = vadd.xlane.f32.xlu0 %v212
  %v214 = vpop.xlane.xlu0 %213
  %v215 = vsel %vm39, %v174, 0.0
  %216 = vadd.xlane.f32.xlu0 %v215
  %v217 = vpop.xlane.xlu0 %216
  %v218 = vsel %vm39, %v175, 0.0
  %219 = vadd.xlane.f32.xlu0 %v218
  %v220 = vpop.xlane.xlu0 %219
  %v221 = vsel %vm39, %v176, 0.0
  %222 = vadd.xlane.f32.xlu0 %v221
  %v223 = vpop.xlane.xlu0 %222
  %v224 = vsel %vm39, %v177, 0.0
  %225 = vadd.xlane.f32.xlu0 %v224
  %v226 = vpop.xlane.xlu0 %225
  %v227 = vsel %vm39, %v178, 0.0
  %228 = vadd.xlane.f32.xlu0 %v227
  %v229 = vpop.xlane.xlu0 %228
  %v230 = vsel %vm39, %v179, 0.0
  %231 = vadd.xlane.f32.xlu0 %v230
  %v232 = vpop.xlane.xlu0 %231
  %v233 = vsel %vm39, %v180, 0.0
  %234 = vadd.xlane.f32.xlu0 %v233
  %v235 = vpop.xlane.xlu0 %234
  %v236 = vsel %vm39, %v181, 0.0
  %237 = vadd.xlane.f32.xlu0 %v236
  %v238 = vpop.xlane.xlu0 %237
  %v239 = vsel %vm39, %v182, 0.0
  %240 = vadd.xlane.f32.xlu0 %v239
  %v241 = vpop.xlane.xlu0 %240
  %v242 = vsel %vm39, %v183, 0.0
  %243 = vadd.xlane.f32.xlu0 %v242
  %v244 = vpop.xlane.xlu0 %243
  %v245 = vsel %vm39, %v184, 0.0
  %246 = vadd.xlane.f32.xlu0 %v245
  %v247 = vpop.xlane.xlu0 %246
  %v248 = vsel %vm39, %v185, 0.0
  %249 = vadd.xlane.f32.xlu0 %v248
  %v250 = vpop.xlane.xlu0 %249
  %v251 = vsel %vm39, %v186, 0.0
  %252 = vadd.xlane.f32.xlu0 %v251
  %v253 = vpop.xlane.xlu0 %252
  %v254 = vsel %vm39, %v187, 0.0
  %255 = vadd.xlane.f32.xlu0 %v254
  %v256 = vpop.xlane.xlu0 %255
  %v257 = vsel %vm39, %v188, 0.0
  %258 = vadd.xlane.f32.xlu0 %v257
  %v259 = vpop.xlane.xlu0 %258
  %v260 = vsel %vm39, %v189, 0.0
  %261 = vadd.xlane.f32.xlu0 %v260
  %v262 = vpop.xlane.xlu0 %261
  %v263 = vsel %vm39, %v190, 0.0
  %264 = vadd.xlane.f32.xlu0 %v263
  %v265 = vpop.xlane.xlu0 %264
  %v266 = vmul.f32 %v193, %v115
  %v267 = vmul.f32 %v196, %v115
  %v268 = vmul.f32 %v199, %v115
  %v269 = vmul.f32 %v202, %v115
  %v270 = vmul.f32 %v205, %v115
  %v271 = vmul.f32 %v208, %v115
  %v272 = vmul.f32 %v211, %v115
  %v273 = vmul.f32 %v214, %v115
  %v274 = vmul.f32 %v217, %v115
  %v275 = vmul.f32 %v220, %v115
  %v276 = vmul.f32 %v223, %v115
  %v277 = vmul.f32 %v226, %v115
  %v278 = vmul.f32 %v229, %v115
  %v279 = vmul.f32 %v232, %v115
  %v280 = vmul.f32 %v235, %v115
  %v281 = vmul.f32 %v238, %v115
  %v282 = vmul.f32 %v241, %v115
  %v283 = vmul.f32 %v244, %v115
  %v284 = vmul.f32 %v247, %v115
  %v285 = vmul.f32 %v250, %v115
  %v286 = vmul.f32 %v253, %v115
  %v287 = vmul.f32 %v256, %v115
  %v288 = vmul.f32 %v259, %v115
  %v289 = vmul.f32 %v262, %v115
  %v290 = vmul.f32 %v265, %v115
  %v291 = vadd.f32 %v266, 1e-05
  %v292 = vadd.f32 %v267, 1e-05
  %v293 = vadd.f32 %v268, 1e-05
  %v294 = vadd.f32 %v269, 1e-05
  %v295 = vadd.f32 %v270, 1e-05
  %v296 = vadd.f32 %v271, 1e-05
  %v297 = vadd.f32 %v272, 1e-05
  %v298 = vadd.f32 %v273, 1e-05
  %v299 = vadd.f32 %v274, 1e-05
  %v300 = vadd.f32 %v275, 1e-05
  %v301 = vadd.f32 %v276, 1e-05
  %v302 = vadd.f32 %v277, 1e-05
  %v303 = vadd.f32 %v278, 1e-05
  %v304 = vadd.f32 %v279, 1e-05
  %v305 = vadd.f32 %v280, 1e-05
  %v306 = vadd.f32 %v281, 1e-05
  %v307 = vadd.f32 %v282, 1e-05
  %v308 = vadd.f32 %v283, 1e-05
  %v309 = vadd.f32 %v284, 1e-05
  %v310 = vadd.f32 %v285, 1e-05
  %v311 = vadd.f32 %v286, 1e-05
  %v312 = vadd.f32 %v287, 1e-05
  %v313 = vadd.f32 %v288, 1e-05
  %v314 = vadd.f32 %v289, 1e-05
  %v315 = vadd.f32 %v290, 1e-05
  %v316 = vrsqrt.pop %v291
  %v317 = vrsqrt.pop %v292
  %v318 = vrsqrt.pop %v293
  %v319 = vrsqrt.pop %v294
  %v320 = vrsqrt.pop %v295
  %v321 = vrsqrt.pop %v296
  %v322 = vrsqrt.pop %v297
  %v323 = vrsqrt.pop %v298
  %v324 = vrsqrt.pop %v299
  %v325 = vrsqrt.pop %v300
  %v326 = vrsqrt.pop %v301
  %v327 = vrsqrt.pop %v302
  %v328 = vrsqrt.pop %v303
  %v329 = vrsqrt.pop %v304
  %v330 = vrsqrt.pop %v305
  %v331 = vrsqrt.pop %v306
  %v332 = vrsqrt.pop %v307
  %v333 = vrsqrt.pop %v308
  %v334 = vrsqrt.pop %v309
  %v335 = vrsqrt.pop %v310
  %v336 = vrsqrt.pop %v311
  %v337 = vrsqrt.pop %v312
  %v338 = vrsqrt.pop %v313
  %v339 = vrsqrt.pop %v314
  %v340 = vrsqrt.pop %v315
  %v341 = vmul.f32 %v141, %v316
  %v342 = vmul.f32 %v142, %v317
  %v343 = vmul.f32 %v143, %v318
  %v344 = vmul.f32 %v144, %v319
  %v345 = vmul.f32 %v145, %v320
  %v346 = vmul.f32 %v146, %v321
  %v347 = vmul.f32 %v147, %v322
  %v348 = vmul.f32 %v148, %v323
  %v349 = vmul.f32 %v149, %v324
  %v350 = vmul.f32 %v150, %v325
  %v351 = vmul.f32 %v151, %v326
  %v352 = vmul.f32 %v152, %v327
  %v353 = vmul.f32 %v153, %v328
  %v354 = vmul.f32 %v154, %v329
  %v355 = vmul.f32 %v155, %v330
  %v356 = vmul.f32 %v156, %v331
  %v357 = vmul.f32 %v157, %v332
  %v358 = vmul.f32 %v158, %v333
  %v359 = vmul.f32 %v159, %v334
  %v360 = vmul.f32 %v160, %v335
  %v361 = vmul.f32 %v161, %v336
  %v362 = vmul.f32 %v162, %v337
  %v363 = vmul.f32 %v163, %v338
  %v364 = vmul.f32 %v164, %v339
  %v365 = vmul.f32 %v165, %v340
  %v366 = vld [vmem:[%s1] sm:$0xff]
  %v367 = vld [vmem:[%s1 + $0x8] sm:$0xff]
  %v368 = vld [vmem:[%s1 + $0x10] sm:$0xff]
  %v369 = vld [vmem:[%s1 + $0x18] sm:$0xff]
  %v370 = vld [vmem:[%s2] sm:$0x1]
  %v372 = vlaneseq
  %v373 = vshrl.u32 %v372, 7
  %v374 = vsub.s32 0, %v373
  %v375 = vrot.slane %v370, %v374
  %v378 = vsel %vm39, %v341, 0
  %v381 = vsel %vm39, %v342, 0
  %v384 = vsel %vm39, %v343, 0
  %v387 = vsel %vm39, %v344, 0
  %v390 = vsel %vm39, %v345, 0
  %v393 = vsel %vm39, %v346, 0
  %v396 = vsel %vm39, %v347, 0
  %v399 = vsel %vm39, %v348, 0
  %v402 = vsel %vm39, %v349, 0
  %v405 = vsel %vm39, %v350, 0
  %v408 = vsel %vm39, %v351, 0
  %v411 = vsel %vm39, %v352, 0
  %v414 = vsel %vm39, %v353, 0
  %v417 = vsel %vm39, %v354, 0
  %v420 = vsel %vm39, %v355, 0
  %v423 = vsel %vm39, %v356, 0
  %v426 = vsel %vm39, %v357, 0
  %v429 = vsel %vm39, %v358, 0
  %v432 = vsel %vm39, %v359, 0
  %v435 = vsel %vm39, %v360, 0
  %v438 = vsel %vm39, %v361, 0
  %v441 = vsel %vm39, %v362, 0
  %v444 = vsel %vm39, %v363, 0
  %v447 = vsel %vm39, %v364, 0
  %v450 = vsel %vm39, %v365, 0
  %452 = vmatprep.subr.mxu0 0.0
  %453 = vmatpush1.msra.mxu0 0.0
  %454 = vmatprep.subr.mxu0 0.0
  %455 = vmatpush1.msra.mxu0 0.0
  %456 = vmatprep.subr.mxu0 0.0
  %457 = vmatpush1.msra.mxu0 0.0
  %458 = vmatprep.subr.mxu0 0.0
  %459 = vmatpush1.msra.mxu0 0.0
  %460 = vmatprep.subr.mxu0 0.0
  %461 = vmatpush1.msra.mxu0 0.0
  %462 = vmatprep.subr.mxu0 0.0
  %463 = vmatpush1.msra.mxu0 0.0
  %464 = vmatprep.subr.mxu0 0.0
  %465 = vmatpush1.msra.mxu0 0.0
  %466 = vmatprep.subr.mxu0 0.0
  %467 = vmatpush1.msra.mxu0 0.0
  %468 = vmatprep.subr.mxu0 0.0
  %469 = vmatpush1.msra.mxu0 0.0
  %470 = vmatprep.subr.mxu0 0.0
  %471 = vmatpush1.msra.mxu0 0.0
  %472 = vmatprep.subr.mxu0 0.0
  %473 = vmatpush1.msra.mxu0 0.0
  %474 = vmatprep.subr.mxu0 0.0
  %475 = vmatpush1.msra.mxu0 0.0
  %476 = vmatprep.subr.mxu0 0.0
  %477 = vmatpush1.msra.mxu0 %v369
  %478 = vmatprep.subr.mxu0 0.0
  %479 = vmatpush1.msra.mxu0 %v368
  %480 = vmatprep.subr.mxu0 0.0
  %481 = vmatpush1.msra.mxu0 %v367
  %482 = vmatprep.subr.mxu0 0.0
  %483 = vmatpush1.msra.mxu0 %v366
  %484 = vmatprep.subr.mxu0 0.0
  %485 = vmatpush2.msra.mxu0 0.0
  %486 = vmatprep.subr.mxu0 0.0
  %487 = vmatpush2.msra.mxu0 0.0
  %488 = vmatprep.subr.mxu0 0.0
  %489 = vmatpush2.msra.mxu0 0.0
  %490 = vmatprep.subr.mxu0 0.0
  %491 = vmatpush2.msra.mxu0 0.0
  %492 = vmatprep.subr.mxu0 0.0
  %493 = vmatpush2.msra.mxu0 0.0
  %494 = vmatprep.subr.mxu0 0.0
  %495 = vmatpush2.msra.mxu0 0.0
  %496 = vmatprep.subr.mxu0 0.0
  %497 = vmatpush2.msra.mxu0 0.0
  %498 = vmatprep.subr.mxu0 0.0
  %499 = vmatpush2.msra.mxu0 0.0
  %500 = vmatprep.subr.mxu0 0.0
  %501 = vmatpush2.msra.mxu0 0.0
  %502 = vmatprep.subr.mxu0 0.0
  %503 = vmatpush2.msra.mxu0 0.0
  %504 = vmatprep.subr.mxu0 0.0
  %505 = vmatpush2.msra.mxu0 0.0
  %506 = vmatprep.subr.mxu0 0.0
  %507 = vmatpush2.msra.mxu0 0.0
  %508 = vmatprep.subr.mxu0 0.0
  %509 = vmatpush2.msra.mxu0 0.0
  %510 = vmatprep.subr.mxu0 0.0
  %511 = vmatpush2.msra.mxu0 0.0
  %512 = vmatprep.subr.mxu0 0.0
  %513 = vmatpush2.msra.mxu0 0.0
  %514 = vmatprep.subr.mxu0 0.0
  %515 = vmatpush2.msra.mxu0 0.0
  %516 = vmatprep.mubr.f32.mxu0 0.0
  %517 = vmatmul.mubr.f32.gmra.mxu0 %v378
  %v518 = vpop.f32.mrf.mxu0
  %v519 = vadd.f32 %v375, %v518
  %v520 = vpop.f32.mrf.mxu0
  %521 = vmatprep.mubr.f32.mxu0 0.0
  %522 = vmatmul.mubr.f32.gmra.mxu0 %v381
  %v523 = vpop.f32.mrf.mxu0
  %v524 = vadd.f32 %v375, %v523
  %v525 = vpop.f32.mrf.mxu0
  %526 = vmatprep.mubr.f32.mxu0 0.0
  %527 = vmatmul.mubr.f32.gmra.mxu0 %v384
  %v528 = vpop.f32.mrf.mxu0
  %v529 = vadd.f32 %v375, %v528
  %v530 = vpop.f32.mrf.mxu0
  %531 = vmatprep.mubr.f32.mxu0 0.0
  %532 = vmatmul.mubr.f32.gmra.mxu0 %v387
  %v533 = vpop.f32.mrf.mxu0
  %v534 = vadd.f32 %v375, %v533
  %v535 = vpop.f32.mrf.mxu0
  %536 = vmatprep.mubr.f32.mxu0 0.0
  %537 = vmatmul.mubr.f32.gmra.mxu0 %v390
  %v538 = vpop.f32.mrf.mxu0
  %v539 = vadd.f32 %v375, %v538
  %v540 = vpop.f32.mrf.mxu0
  %541 = vmatprep.mubr.f32.mxu0 0.0
  %542 = vmatmul.mubr.f32.gmra.mxu0 %v393
  %v543 = vpop.f32.mrf.mxu0
  %v544 = vadd.f32 %v375, %v543
  %v545 = vpop.f32.mrf.mxu0
  %546 = vmatprep.mubr.f32.mxu0 0.0
  %547 = vmatmul.mubr.f32.gmra.mxu0 %v396
  %v548 = vpop.f32.mrf.mxu0
  %v549 = vadd.f32 %v375, %v548
  %v550 = vpop.f32.mrf.mxu0
  %551 = vmatprep.mubr.f32.mxu0 0.0
  %552 = vmatmul.mubr.f32.gmra.mxu0 %v399
  %v553 = vpop.f32.mrf.mxu0
  %v554 = vadd.f32 %v375, %v553
  %v555 = vpop.f32.mrf.mxu0
  %556 = vmatprep.mubr.f32.mxu0 0.0
  %557 = vmatmul.mubr.f32.gmra.mxu0 %v402
  %v558 = vpop.f32.mrf.mxu0
  %v559 = vadd.f32 %v375, %v558
  %v560 = vpop.f32.mrf.mxu0
  %561 = vmatprep.mubr.f32.mxu0 0.0
  %562 = vmatmul.mubr.f32.gmra.mxu0 %v405
  %v563 = vpop.f32.mrf.mxu0
  %v564 = vadd.f32 %v375, %v563
  %v565 = vpop.f32.mrf.mxu0
  %566 = vmatprep.mubr.f32.mxu0 0.0
  %567 = vmatmul.mubr.f32.gmra.mxu0 %v408
  %v568 = vpop.f32.mrf.mxu0
  %v569 = vadd.f32 %v375, %v568
  %v570 = vpop.f32.mrf.mxu0
  %571 = vmatprep.mubr.f32.mxu0 0.0
  %572 = vmatmul.mubr.f32.gmra.mxu0 %v411
  %v573 = vpop.f32.mrf.mxu0
  %v574 = vadd.f32 %v375, %v573
  %v575 = vpop.f32.mrf.mxu0
  %576 = vmatprep.mubr.f32.mxu0 0.0
  %577 = vmatmul.mubr.f32.gmra.mxu0 %v414
  %v578 = vpop.f32.mrf.mxu0
  %v579 = vadd.f32 %v375, %v578
  %v580 = vpop.f32.mrf.mxu0
  %581 = vmatprep.mubr.f32.mxu0 0.0
  %582 = vmatmul.mubr.f32.gmra.mxu0 %v417
  %v583 = vpop.f32.mrf.mxu0
  %v584 = vadd.f32 %v375, %v583
  %v585 = vpop.f32.mrf.mxu0
  %586 = vmatprep.mubr.f32.mxu0 0.0
  %587 = vmatmul.mubr.f32.gmra.mxu0 %v420
  %v588 = vpop.f32.mrf.mxu0
  %v589 = vadd.f32 %v375, %v588
  %v590 = vpop.f32.mrf.mxu0
  %591 = vmatprep.mubr.f32.mxu0 0.0
  %592 = vmatmul.mubr.f32.gmra.mxu0 %v423
  %v593 = vpop.f32.mrf.mxu0
  %v594 = vadd.f32 %v375, %v593
  %v595 = vpop.f32.mrf.mxu0
  %596 = vmatprep.mubr.f32.mxu0 0.0
  %597 = vmatmul.mubr.f32.gmra.mxu0 %v426
  %v598 = vpop.f32.mrf.mxu0
  %v599 = vadd.f32 %v375, %v598
  %v600 = vpop.f32.mrf.mxu0
  %601 = vmatprep.mubr.f32.mxu0 0.0
  %602 = vmatmul.mubr.f32.gmra.mxu0 %v429
  %v603 = vpop.f32.mrf.mxu0
  %v604 = vadd.f32 %v375, %v603
  %v605 = vpop.f32.mrf.mxu0
  %606 = vmatprep.mubr.f32.mxu0 0.0
  %607 = vmatmul.mubr.f32.gmra.mxu0 %v432
  %v608 = vpop.f32.mrf.mxu0
  %v609 = vadd.f32 %v375, %v608
  %v610 = vpop.f32.mrf.mxu0
  %611 = vmatprep.mubr.f32.mxu0 0.0
  %612 = vmatmul.mubr.f32.gmra.mxu0 %v435
  %v613 = vpop.f32.mrf.mxu0
  %v614 = vadd.f32 %v375, %v613
  %v615 = vpop.f32.mrf.mxu0
  %616 = vmatprep.mubr.f32.mxu0 0.0
  %617 = vmatmul.mubr.f32.gmra.mxu0 %v438
  %v618 = vpop.f32.mrf.mxu0
  %v619 = vadd.f32 %v375, %v618
  %v620 = vpop.f32.mrf.mxu0
  %621 = vmatprep.mubr.f32.mxu0 0.0
  %622 = vmatmul.mubr.f32.gmra.mxu0 %v441
  %v623 = vpop.f32.mrf.mxu0
  %v624 = vadd.f32 %v375, %v623
  %v625 = vpop.f32.mrf.mxu0
  %626 = vmatprep.mubr.f32.mxu0 0.0
  %627 = vmatmul.mubr.f32.gmra.mxu0 %v444
  %v628 = vpop.f32.mrf.mxu0
  %v629 = vadd.f32 %v375, %v628
  %v630 = vpop.f32.mrf.mxu0
  %631 = vmatprep.mubr.f32.mxu0 0.0
  %632 = vmatmul.mubr.f32.gmra.mxu0 %v447
  %v633 = vpop.f32.mrf.mxu0
  %v634 = vadd.f32 %v375, %v633
  %v635 = vpop.f32.mrf.mxu0
  %636 = vmatprep.mubr.f32.mxu0 0.0
  %637 = vmatmul.mubr.f32.gmra.mxu0 %v450
  %v638 = vpop.f32.mrf.mxu0
  %v639 = vadd.f32 %v375, %v638
  %v640 = vpop.f32.mrf.mxu0
  %641 = vdwg.mxu0
  %642 = vst.msk [vmem:[%s3] sm:$0xff] %vm39, %v519
  %643 = vst.msk [vmem:[%s3 + $0x8] sm:$0xff] %vm39, %v524
  %644 = vst.msk [vmem:[%s3 + $0x10] sm:$0xff] %vm39, %v529
  %645 = vst.msk [vmem:[%s3 + $0x18] sm:$0xff] %vm39, %v534
  %646 = vst.msk [vmem:[%s3 + $0x20] sm:$0xff] %vm39, %v539
  %647 = vst.msk [vmem:[%s3 + $0x28] sm:$0xff] %vm39, %v544
  %648 = vst.msk [vmem:[%s3 + $0x30] sm:$0xff] %vm39, %v549
  %649 = vst.msk [vmem:[%s3 + $0x38] sm:$0xff] %vm39, %v554
  %650 = vst.msk [vmem:[%s3 + $0x40] sm:$0xff] %vm39, %v559
  %651 = vst.msk [vmem:[%s3 + $0x48] sm:$0xff] %vm39, %v564
  %652 = vst.msk [vmem:[%s3 + $0x50] sm:$0xff] %vm39, %v569
  %653 = vst.msk [vmem:[%s3 + $0x58] sm:$0xff] %vm39, %v574
  %654 = vst.msk [vmem:[%s3 + $0x60] sm:$0xff] %vm39, %v579
  %655 = vst.msk [vmem:[%s3 + $0x68] sm:$0xff] %vm39, %v584
  %656 = vst.msk [vmem:[%s3 + $0x70] sm:$0xff] %vm39, %v589
  %657 = vst.msk [vmem:[%s3 + $0x78] sm:$0xff] %vm39, %v594
  %658 = vst.msk [vmem:[%s3 + $0x80] sm:$0xff] %vm39, %v599
  %659 = vst.msk [vmem:[%s3 + $0x88] sm:$0xff] %vm39, %v604
  %660 = vst.msk [vmem:[%s3 + $0x90] sm:$0xff] %vm39, %v609
  %661 = vst.msk [vmem:[%s3 + $0x98] sm:$0xff] %vm39, %v614
  %662 = vst.msk [vmem:[%s3 + $0xa0] sm:$0xff] %vm39, %v619
  %663 = vst.msk [vmem:[%s3 + $0xa8] sm:$0xff] %vm39, %v624
  %664 = vst.msk [vmem:[%s3 + $0xb0] sm:$0xff] %vm39, %v629
  %665 = vst.msk [vmem:[%s3 + $0xb8] sm:$0xff] %vm39, %v634
  %666 = vst.msk [vmem:[%s3 + $0xc0] sm:$0xff] %vm39, %v639
  // Predicated region
  $region14: #{tpu_custom_call.1} parent=0 // pred_check
    _
  $region15: #{tpu_custom_call.1} parent=0 // pred_check_branch
    %668 = sbr.rel (0) target = $region17
  $region16: #{tpu_custom_call.1} parent=0 // pred_region
    _
  $region17: #{tpu_custom_call.1} parent=0 // pred_fallthru
    _
  // Predicated region
  $region18: #{tpu_custom_call.1} parent=0 // pred_check
    _
  $region19: #{tpu_custom_call.1} parent=0 // pred_check_branch
    %670 = sbr.rel (0) target = $region21
  $region20: #{tpu_custom_call.1} parent=0 // pred_region
    _
  $region21: #{tpu_custom_call.1} parent=0 // pred_fallthru
    _

// kernel: tpu_custom_call.1
$region0: #{tpu_custom_call.1}
  #allocation0 [shape = 'u32[]', space=smem, size = 0x4, offset = 0x4, fixed_abs, tag = 'smem constant byte address 0x4 - core index']
  #allocation1 [shape = 'u32[144,128]{1,0:T(1,128)}', space=vmem, size = 0x12000, scoped, tag = 'internal scratch']
  %s0 = inlined_call_operand.vmem [shape: f32[200,32], index: 0, kind: input, shape index: {}]
  %s1 = inlined_call_operand.vmem [shape: f32[32,32], index: 1, kind: input, shape index: {}]
  %s2 = inlined_call_operand.vmem [shape: f32[1,32], index: 2, kind: input, shape index: {}]
  %s3 = inlined_call_operand.vmem [shape: f32[200,32], index: 3, kind: output, shape index: {}]
  %s4 = sld [smem:[#allocation0]]
  $region22: #{tpu_custom_call.1} parent=0
    _
  %s6 = ssub.s32 1, %s4
  %s7 = scalar_select 0, %s6, %s4
  // Predicated region
  $region2: #{tpu_custom_call.1} parent=0 // pred_check
    _
  $region3: #{tpu_custom_call.1} parent=0 // pred_check_branch
    %9 = sbr.rel (0) target = $region5
  $region4: #{tpu_custom_call.1} parent=0 // pred_region
    _
  $region5: #{tpu_custom_call.1} parent=0 // pred_fallthru
    _
  // Predicated region
  $region6: #{tpu_custom_call.1} parent=0 // pred_check
    _
  $region7: #{tpu_custom_call.1} parent=0 // pred_check_branch
    %11 = sbr.rel (0) target = $region9
  $region8: #{tpu_custom_call.1} parent=0 // pred_region
    _
  $region9: #{tpu_custom_call.1} parent=0 // pred_fallthru
    _
  // Predicated region
  $region10: #{tpu_custom_call.1} parent=0 // pred_check
    _
  $region11: #{tpu_custom_call.1} parent=0 // pred_check_branch
    %13 = sbr.rel (0) target = $region13
  $region12: #{tpu_custom_call.1} parent=0 // pred_region
    _
  $region13: #{tpu_custom_call.1} parent=0 // pred_fallthru
    _
  %v14 = vld [vmem:[%s0] sm:$0xff]
  %v15 = vld [vmem:[%s0 + $0x8] sm:$0xff]
  %v16 = vld [vmem:[%s0 + $0x10] sm:$0xff]
  %v17 = vld [vmem:[%s0 + $0x18] sm:$0xff]
  %v18 = vld [vmem:[%s0 + $0x20] sm:$0xff]
  %v19 = vld [vmem:[%s0 + $0x28] sm:$0xff]
  %v20 = vld [vmem:[%s0 + $0x30] sm:$0xff]
  %v21 = vld [vmem:[%s0 + $0x38] sm:$0xff]
  %v22 = vld [vmem:[%s0 + $0x40] sm:$0xff]
  %v23 = vld [vmem:[%s0 + $0x48] sm:$0xff]
  %v24 = vld [vmem:[%s0 + $0x50] sm:$0xff]
  %v25 = vld [vmem:[%s0 + $0x58] sm:$0xff]
  %v26 = vld [vmem:[%s0 + $0x60] sm:$0xff]
  %v27 = vld [vmem:[%s0 + $0x68] sm:$0xff]
  %v28 = vld [vmem:[%s0 + $0x70] sm:$0xff]
  %v29 = vld [vmem:[%s0 + $0x78] sm:$0xff]
  %v30 = vld [vmem:[%s0 + $0x80] sm:$0xff]
  %v31 = vld [vmem:[%s0 + $0x88] sm:$0xff]
  %v32 = vld [vmem:[%s0 + $0x90] sm:$0xff]
  %v33 = vld [vmem:[%s0 + $0x98] sm:$0xff]
  %v34 = vld [vmem:[%s0 + $0xa0] sm:$0xff]
  %v35 = vld [vmem:[%s0 + $0xa8] sm:$0xff]
  %v36 = vld [vmem:[%s0 + $0xb0] sm:$0xff]
  %v37 = vld [vmem:[%s0 + $0xb8] sm:$0xff]
  %v38 = vld [vmem:[%s0 + $0xc0] sm:$0xff]
  %vm39 = vcmask 261120
  %v40 = vsel %vm39, %v14, 0.0
  %41 = vadd.xlane.f32.xlu0 %v40
  %v42 = vpop.xlane.xlu0 %41
  %v43 = vsel %vm39, %v15, 0.0
  %44 = vadd.xlane.f32.xlu0 %v43
  %v45 = vpop.xlane.xlu0 %44
  %v46 = vsel %vm39, %v16, 0.0
  %47 = vadd.xlane.f32.xlu0 %v46
  %v48 = vpop.xlane.xlu0 %47
  %v49 = vsel %vm39, %v17, 0.0
  %50 = vadd.xlane.f32.xlu0 %v49
  %v51 = vpop.xlane.xlu0 %50
  %v52 = vsel %vm39, %v18, 0.0
  %53 = vadd.xlane.f32.xlu0 %v52
  %v54 = vpop.xlane.xlu0 %53
  %v55 = vsel %vm39, %v19, 0.0
  %56 = vadd.xlane.f32.xlu0 %v55
  %v57 = vpop.xlane.xlu0 %56
  %v58 = vsel %vm39, %v20, 0.0
  %59 = vadd.xlane.f32.xlu0 %v58
  %v60 = vpop.xlane.xlu0 %59
  %v61 = vsel %vm39, %v21, 0.0
  %62 = vadd.xlane.f32.xlu0 %v61
  %v63 = vpop.xlane.xlu0 %62
  %v64 = vsel %vm39, %v22, 0.0
  %65 = vadd.xlane.f32.xlu0 %v64
  %v66 = vpop.xlane.xlu0 %65
  %v67 = vsel %vm39, %v23, 0.0
  %68 = vadd.xlane.f32.xlu0 %v67
  %v69 = vpop.xlane.xlu0 %68
  %v70 = vsel %vm39, %v24, 0.0
  %71 = vadd.xlane.f32.xlu0 %v70
  %v72 = vpop.xlane.xlu0 %71
  %v73 = vsel %vm39, %v25, 0.0
  %74 = vadd.xlane.f32.xlu0 %v73
  %v75 = vpop.xlane.xlu0 %74
  %v76 = vsel %vm39, %v26, 0.0
  %77 = vadd.xlane.f32.xlu0 %v76
  %v78 = vpop.xlane.xlu0 %77
  %v79 = vsel %vm39, %v27, 0.0
  %80 = vadd.xlane.f32.xlu0 %v79
  %v81 = vpop.xlane.xlu0 %80
  %v82 = vsel %vm39, %v28, 0.0
  %83 = vadd.xlane.f32.xlu0 %v82
  %v84 = vpop.xlane.xlu0 %83
  %v85 = vsel %vm39, %v29, 0.0
  %86 = vadd.xlane.f32.xlu0 %v85
  %v87 = vpop.xlane.xlu0 %86
  %v88 = vsel %vm39, %v30, 0.0
  %89 = vadd.xlane.f32.xlu0 %v88
  %v90 = vpop.xlane.xlu0 %89
  %v91 = vsel %vm39, %v31, 0.0
  %92 = vadd.xlane.f32.xlu0 %v91
  %v93 = vpop.xlane.xlu0 %92
  %v94 = vsel %vm39, %v32, 0.0
  %95 = vadd.xlane.f32.xlu0 %v94
  %v96 = vpop.xlane.xlu0 %95
  %v97 = vsel %vm39, %v33, 0.0
  %98 = vadd.xlane.f32.xlu0 %v97
  %v99 = vpop.xlane.xlu0 %98
  %v100 = vsel %vm39, %v34, 0.0
  %101 = vadd.xlane.f32.xlu0 %v100
  %v102 = vpop.xlane.xlu0 %101
  %v103 = vsel %vm39, %v35, 0.0
  %104 = vadd.xlane.f32.xlu0 %v103
  %v105 = vpop.xlane.xlu0 %104
  %v106 = vsel %vm39, %v36, 0.0
  %107 = vadd.xlane.f32.xlu0 %v106
  %v108 = vpop.xlane.xlu0 %107
  %v109 = vsel %vm39, %v37, 0.0
  %110 = vadd.xlane.f32.xlu0 %v109
  %v111 = vpop.xlane.xlu0 %110
  %v112 = vsel %vm39, %v38, 0.0
  %113 = vadd.xlane.f32.xlu0 %v112
  %v114 = vpop.xlane.xlu0 %113
  %v115 = vrcp.pop 32.0
  %v116 = vmul.f32 %v42, %v115
  %v117 = vmul.f32 %v45, %v115
  %v118 = vmul.f32 %v48, %v115
  %v119 = vmul.f32 %v51, %v115
  %v120 = vmul.f32 %v54, %v115
  %v121 = vmul.f32 %v57, %v115
  %v122 = vmul.f32 %v60, %v115
  %v123 = vmul.f32 %v63, %v115
  %v124 = vmul.f32 %v66, %v115
  %v125 = vmul.f32 %v69, %v115
  %v126 = vmul.f32 %v72, %v115
  %v127 = vmul.f32 %v75, %v115
  %v128 = vmul.f32 %v78, %v115
  %v129 = vmul.f32 %v81, %v115
  %v130 = vmul.f32 %v84, %v115
  %v131 = vmul.f32 %v87, %v115
  %v132 = vmul.f32 %v90, %v115
  %v133 = vmul.f32 %v93, %v115
  %v134 = vmul.f32 %v96, %v115
  %v135 = vmul.f32 %v99, %v115
  %v136 = vmul.f32 %v102, %v115
  %v137 = vmul.f32 %v105, %v115
  %v138 = vmul.f32 %v108, %v115
  %v139 = vmul.f32 %v111, %v115
  %v140 = vmul.f32 %v114, %v115
  %v141 = vsub.f32 %v14, %v116
  %v142 = vsub.f32 %v15, %v117
  %v143 = vsub.f32 %v16, %v118
  %v144 = vsub.f32 %v17, %v119
  %v145 = vsub.f32 %v18, %v120
  %v146 = vsub.f32 %v19, %v121
  %v147 = vsub.f32 %v20, %v122
  %v148 = vsub.f32 %v21, %v123
  %v149 = vsub.f32 %v22, %v124
  %v150 = vsub.f32 %v23, %v125
  %v151 = vsub.f32 %v24, %v126
  %v152 = vsub.f32 %v25, %v127
  %v153 = vsub.f32 %v26, %v128
  %v154 = vsub.f32 %v27, %v129
  %v155 = vsub.f32 %v28, %v130
  %v156 = vsub.f32 %v29, %v131
  %v157 = vsub.f32 %v30, %v132
  %v158 = vsub.f32 %v31, %v133
  %v159 = vsub.f32 %v32, %v134
  %v160 = vsub.f32 %v33, %v135
  %v161 = vsub.f32 %v34, %v136
  %v162 = vsub.f32 %v35, %v137
  %v163 = vsub.f32 %v36, %v138
  %v164 = vsub.f32 %v37, %v139
  %v165 = vsub.f32 %v38, %v140
  %v166 = vmul.f32 %v141, %v141
  %v167 = vmul.f32 %v142, %v142
  %v168 = vmul.f32 %v143, %v143
  %v169 = vmul.f32 %v144, %v144
  %v170 = vmul.f32 %v145, %v145
  %v171 = vmul.f32 %v146, %v146
  %v172 = vmul.f32 %v147, %v147
  %v173 = vmul.f32 %v148, %v148
  %v174 = vmul.f32 %v149, %v149
  %v175 = vmul.f32 %v150, %v150
  %v176 = vmul.f32 %v151, %v151
  %v177 = vmul.f32 %v152, %v152
  %v178 = vmul.f32 %v153, %v153
  %v179 = vmul.f32 %v154, %v154
  %v180 = vmul.f32 %v155, %v155
  %v181 = vmul.f32 %v156, %v156
  %v182 = vmul.f32 %v157, %v157
  %v183 = vmul.f32 %v158, %v158
  %v184 = vmul.f32 %v159, %v159
  %v185 = vmul.f32 %v160, %v160
  %v186 = vmul.f32 %v161, %v161
  %v187 = vmul.f32 %v162, %v162
  %v188 = vmul.f32 %v163, %v163
  %v189 = vmul.f32 %v164, %v164
  %v190 = vmul.f32 %v165, %v165
  %v191 = vsel %vm39, %v166, 0.0
  %192 = vadd.xlane.f32.xlu0 %v191
  %v193 = vpop.xlane.xlu0 %192
  %v194 = vsel %vm39, %v167, 0.0
  %195 = vadd.xlane.f32.xlu0 %v194
  %v196 = vpop.xlane.xlu0 %195
  %v197 = vsel %vm39, %v168, 0.0
  %198 = vadd.xlane.f32.xlu0 %v197
  %v199 = vpop.xlane.xlu0 %198
  %v200 = vsel %vm39, %v169, 0.0
  %201 = vadd.xlane.f32.xlu0 %v200
  %v202 = vpop.xlane.xlu0 %201
  %v203 = vsel %vm39, %v170, 0.0
  %204 = vadd.xlane.f32.xlu0 %v203
  %v205 = vpop.xlane.xlu0 %204
  %v206 = vsel %vm39, %v171, 0.0
  %207 = vadd.xlane.f32.xlu0 %v206
  %v208 = vpop.xlane.xlu0 %207
  %v209 = vsel %vm39, %v172, 0.0
  %210 = vadd.xlane.f32.xlu0 %v209
  %v211 = vpop.xlane.xlu0 %210
  %v212 = vsel %vm39, %v173, 0.0
  %213 = vadd.xlane.f32.xlu0 %v212
  %v214 = vpop.xlane.xlu0 %213
  %v215 = vsel %vm39, %v174, 0.0
  %216 = vadd.xlane.f32.xlu0 %v215
  %v217 = vpop.xlane.xlu0 %216
  %v218 = vsel %vm39, %v175, 0.0
  %219 = vadd.xlane.f32.xlu0 %v218
  %v220 = vpop.xlane.xlu0 %219
  %v221 = vsel %vm39, %v176, 0.0
  %222 = vadd.xlane.f32.xlu0 %v221
  %v223 = vpop.xlane.xlu0 %222
  %v224 = vsel %vm39, %v177, 0.0
  %225 = vadd.xlane.f32.xlu0 %v224
  %v226 = vpop.xlane.xlu0 %225
  %v227 = vsel %vm39, %v178, 0.0
  %228 = vadd.xlane.f32.xlu0 %v227
  %v229 = vpop.xlane.xlu0 %228
  %v230 = vsel %vm39, %v179, 0.0
  %231 = vadd.xlane.f32.xlu0 %v230
  %v232 = vpop.xlane.xlu0 %231
  %v233 = vsel %vm39, %v180, 0.0
  %234 = vadd.xlane.f32.xlu0 %v233
  %v235 = vpop.xlane.xlu0 %234
  %v236 = vsel %vm39, %v181, 0.0
  %237 = vadd.xlane.f32.xlu0 %v236
  %v238 = vpop.xlane.xlu0 %237
  %v239 = vsel %vm39, %v182, 0.0
  %240 = vadd.xlane.f32.xlu0 %v239
  %v241 = vpop.xlane.xlu0 %240
  %v242 = vsel %vm39, %v183, 0.0
  %243 = vadd.xlane.f32.xlu0 %v242
  %v244 = vpop.xlane.xlu0 %243
  %v245 = vsel %vm39, %v184, 0.0
  %246 = vadd.xlane.f32.xlu0 %v245
  %v247 = vpop.xlane.xlu0 %246
  %v248 = vsel %vm39, %v185, 0.0
  %249 = vadd.xlane.f32.xlu0 %v248
  %v250 = vpop.xlane.xlu0 %249
  %v251 = vsel %vm39, %v186, 0.0
  %252 = vadd.xlane.f32.xlu0 %v251
  %v253 = vpop.xlane.xlu0 %252
  %v254 = vsel %vm39, %v187, 0.0
  %255 = vadd.xlane.f32.xlu0 %v254
  %v256 = vpop.xlane.xlu0 %255
  %v257 = vsel %vm39, %v188, 0.0
  %258 = vadd.xlane.f32.xlu0 %v257
  %v259 = vpop.xlane.xlu0 %258
  %v260 = vsel %vm39, %v189, 0.0
  %261 = vadd.xlane.f32.xlu0 %v260
  %v262 = vpop.xlane.xlu0 %261
  %v263 = vsel %vm39, %v190, 0.0
  %264 = vadd.xlane.f32.xlu0 %v263
  %v265 = vpop.xlane.xlu0 %264
  %v266 = vmul.f32 %v193, %v115
  %v267 = vmul.f32 %v196, %v115
  %v268 = vmul.f32 %v199, %v115
  %v269 = vmul.f32 %v202, %v115
  %v270 = vmul.f32 %v205, %v115
  %v271 = vmul.f32 %v208, %v115
  %v272 = vmul.f32 %v211, %v115
  %v273 = vmul.f32 %v214, %v115
  %v274 = vmul.f32 %v217, %v115
  %v275 = vmul.f32 %v220, %v115
  %v276 = vmul.f32 %v223, %v115
  %v277 = vmul.f32 %v226, %v115
  %v278 = vmul.f32 %v229, %v115
  %v279 = vmul.f32 %v232, %v115
  %v280 = vmul.f32 %v235, %v115
  %v281 = vmul.f32 %v238, %v115
  %v282 = vmul.f32 %v241, %v115
  %v283 = vmul.f32 %v244, %v115
  %v284 = vmul.f32 %v247, %v115
  %v285 = vmul.f32 %v250, %v115
  %v286 = vmul.f32 %v253, %v115
  %v287 = vmul.f32 %v256, %v115
  %v288 = vmul.f32 %v259, %v115
  %v289 = vmul.f32 %v262, %v115
  %v290 = vmul.f32 %v265, %v115
  %v291 = vadd.f32 %v266, 1e-05
  %v292 = vadd.f32 %v267, 1e-05
  %v293 = vadd.f32 %v268, 1e-05
  %v294 = vadd.f32 %v269, 1e-05
  %v295 = vadd.f32 %v270, 1e-05
  %v296 = vadd.f32 %v271, 1e-05
  %v297 = vadd.f32 %v272, 1e-05
  %v298 = vadd.f32 %v273, 1e-05
  %v299 = vadd.f32 %v274, 1e-05
  %v300 = vadd.f32 %v275, 1e-05
  %v301 = vadd.f32 %v276, 1e-05
  %v302 = vadd.f32 %v277, 1e-05
  %v303 = vadd.f32 %v278, 1e-05
  %v304 = vadd.f32 %v279, 1e-05
  %v305 = vadd.f32 %v280, 1e-05
  %v306 = vadd.f32 %v281, 1e-05
  %v307 = vadd.f32 %v282, 1e-05
  %v308 = vadd.f32 %v283, 1e-05
  %v309 = vadd.f32 %v284, 1e-05
  %v310 = vadd.f32 %v285, 1e-05
  %v311 = vadd.f32 %v286, 1e-05
  %v312 = vadd.f32 %v287, 1e-05
  %v313 = vadd.f32 %v288, 1e-05
  %v314 = vadd.f32 %v289, 1e-05
  %v315 = vadd.f32 %v290, 1e-05
  %v316 = vrsqrt.pop %v291
  %v317 = vrsqrt.pop %v292
  %v318 = vrsqrt.pop %v293
  %v319 = vrsqrt.pop %v294
  %v320 = vrsqrt.pop %v295
  %v321 = vrsqrt.pop %v296
  %v322 = vrsqrt.pop %v297
  %v323 = vrsqrt.pop %v298
  %v324 = vrsqrt.pop %v299
  %v325 = vrsqrt.pop %v300
  %v326 = vrsqrt.pop %v301
  %v327 = vrsqrt.pop %v302
  %v328 = vrsqrt.pop %v303
  %v329 = vrsqrt.pop %v304
  %v330 = vrsqrt.pop %v305
  %v331 = vrsqrt.pop %v306
  %v332 = vrsqrt.pop %v307
  %v333 = vrsqrt.pop %v308
  %v334 = vrsqrt.pop %v309
  %v335 = vrsqrt.pop %v310
  %v336 = vrsqrt.pop %v311
  %v337 = vrsqrt.pop %v312
  %v338 = vrsqrt.pop %v313
  %v339 = vrsqrt.pop %v314
  %v340 = vrsqrt.pop %v315
  %v341 = vmul.f32 %v141, %v316
  %v342 = vmul.f32 %v142, %v317
  %v343 = vmul.f32 %v143, %v318
  %v344 = vmul.f32 %v144, %v319
  %v345 = vmul.f32 %v145, %v320
  %v346 = vmul.f32 %v146, %v321
  %v347 = vmul.f32 %v147, %v322
  %v348 = vmul.f32 %v148, %v323
  %v349 = vmul.f32 %v149, %v324
  %v350 = vmul.f32 %v150, %v325
  %v351 = vmul.f32 %v151, %v326
  %v352 = vmul.f32 %v152, %v327
  %v353 = vmul.f32 %v153, %v328
  %v354 = vmul.f32 %v154, %v329
  %v355 = vmul.f32 %v155, %v330
  %v356 = vmul.f32 %v156, %v331
  %v357 = vmul.f32 %v157, %v332
  %v358 = vmul.f32 %v158, %v333
  %v359 = vmul.f32 %v159, %v334
  %v360 = vmul.f32 %v160, %v335
  %v361 = vmul.f32 %v161, %v336
  %v362 = vmul.f32 %v162, %v337
  %v363 = vmul.f32 %v163, %v338
  %v364 = vmul.f32 %v164, %v339
  %v365 = vmul.f32 %v165, %v340
  %v366 = vld [vmem:[%s1] sm:$0xff]
  %v367 = vld [vmem:[%s1 + $0x8] sm:$0xff]
  %v368 = vld [vmem:[%s1 + $0x10] sm:$0xff]
  %v369 = vld [vmem:[%s1 + $0x18] sm:$0xff]
  %v370 = vld [vmem:[%s2] sm:$0x1]
  %v372 = vlaneseq
  %v373 = vshrl.u32 %v372, 7
  %v374 = vsub.s32 0, %v373
  %v375 = vrot.slane %v370, %v374
  %v378 = vsel %vm39, %v341, 0
  %v381 = vsel %vm39, %v342, 0
  %v384 = vsel %vm39, %v343, 0
  %v387 = vsel %vm39, %v344, 0
  %v390 = vsel %vm39, %v345, 0
  %v393 = vsel %vm39, %v346, 0
  %v396 = vsel %vm39, %v347, 0
  %v399 = vsel %vm39, %v348, 0
  %v402 = vsel %vm39, %v349, 0
  %v405 = vsel %vm39, %v350, 0
  %v408 = vsel %vm39, %v351, 0
  %v411 = vsel %vm39, %v352, 0
  %v414 = vsel %vm39, %v353, 0
  %v417 = vsel %vm39, %v354, 0
  %v420 = vsel %vm39, %v355, 0
  %v423 = vsel %vm39, %v356, 0
  %v426 = vsel %vm39, %v357, 0
  %v429 = vsel %vm39, %v358, 0
  %v432 = vsel %vm39, %v359, 0
  %v435 = vsel %vm39, %v360, 0
  %v438 = vsel %vm39, %v361, 0
  %v441 = vsel %vm39, %v362, 0
  %v444 = vsel %vm39, %v363, 0
  %v447 = vsel %vm39, %v364, 0
  %v450 = vsel %vm39, %v365, 0
  %452 = vmatprep.subr.mxu0 0.0
  %453 = vmatpush1.msra.mxu0 0.0
  %454 = vmatprep.subr.mxu0 0.0
  %455 = vmatpush1.msra.mxu0 0.0
  %456 = vmatprep.subr.mxu0 0.0
  %457 = vmatpush1.msra.mxu0 0.0
  %458 = vmatprep.subr.mxu0 0.0
  %459 = vmatpush1.msra.mxu0 0.0
  %460 = vmatprep.subr.mxu0 0.0
  %461 = vmatpush1.msra.mxu0 0.0
  %462 = vmatprep.subr.mxu0 0.0
  %463 = vmatpush1.msra.mxu0 0.0
  %464 = vmatprep.subr.mxu0 0.0
  %465 = vmatpush1.msra.mxu0 0.0
  %466 = vmatprep.subr.mxu0 0.0
  %467 = vmatpush1.msra.mxu0 0.0
  %468 = vmatprep.subr.mxu0 0.0
  %469 = vmatpush1.msra.mxu0 0.0
  %470 = vmatprep.subr.mxu0 0.0
  %471 = vmatpush1.msra.mxu0 0.0
  %472 = vmatprep.subr.mxu0 0.0
  %473 = vmatpush1.msra.mxu0 0.0
  %474 = vmatprep.subr.mxu0 0.0
  %475 = vmatpush1.msra.mxu0 0.0
  %476 = vmatprep.subr.mxu0 0.0
  %477 = vmatpush1.msra.mxu0 %v369
  %478 = vmatprep.subr.mxu0 0.0
  %479 = vmatpush1.msra.mxu0 %v368
  %480 = vmatprep.subr.mxu0 0.0
  %481 = vmatpush1.msra.mxu0 %v367
  %482 = vmatprep.subr.mxu0 0.0
  %483 = vmatpush1.msra.mxu0 %v366
  %484 = vmatprep.subr.mxu0 0.0
  %485 = vmatpush2.msra.mxu0 0.0
  %486 = vmatprep.subr.mxu0 0.0
  %487 = vmatpush2.msra.mxu0 0.0
  %488 = vmatprep.subr.mxu0 0.0
  %489 = vmatpush2.msra.mxu0 0.0
  %490 = vmatprep.subr.mxu0 0.0
  %491 = vmatpush2.msra.mxu0 0.0
  %492 = vmatprep.subr.mxu0 0.0
  %493 = vmatpush2.msra.mxu0 0.0
  %494 = vmatprep.subr.mxu0 0.0
  %495 = vmatpush2.msra.mxu0 0.0
  %496 = vmatprep.subr.mxu0 0.0
  %497 = vmatpush2.msra.mxu0 0.0
  %498 = vmatprep.subr.mxu0 0.0
  %499 = vmatpush2.msra.mxu0 0.0
  %500 = vmatprep.subr.mxu0 0.0
  %501 = vmatpush2.msra.mxu0 0.0
  %502 = vmatprep.subr.mxu0 0.0
  %503 = vmatpush2.msra.mxu0 0.0
  %504 = vmatprep.subr.mxu0 0.0
  %505 = vmatpush2.msra.mxu0 0.0
  %506 = vmatprep.subr.mxu0 0.0
  %507 = vmatpush2.msra.mxu0 0.0
  %508 = vmatprep.subr.mxu0 0.0
  %509 = vmatpush2.msra.mxu0 0.0
  %510 = vmatprep.subr.mxu0 0.0
  %511 = vmatpush2.msra.mxu0 0.0
  %512 = vmatprep.subr.mxu0 0.0
  %513 = vmatpush2.msra.mxu0 0.0
  %514 = vmatprep.subr.mxu0 0.0
  %515 = vmatpush2.msra.mxu0 0.0
  %516 = vmatprep.mubr.f32.mxu0 0.0
  %517 = vmatmul.mubr.f32.gmra.mxu0 %v378
  %v518 = vpop.f32.mrf.mxu0
  %v519 = vadd.f32 %v375, %v518
  %v520 = vpop.f32.mrf.mxu0
  %521 = vmatprep.mubr.f32.mxu0 0.0
  %522 = vmatmul.mubr.f32.gmra.mxu0 %v381
  %v523 = vpop.f32.mrf.mxu0
  %v524 = vadd.f32 %v375, %v523
  %v525 = vpop.f32.mrf.mxu0
  %526 = vmatprep.mubr.f32.mxu0 0.0
  %527 = vmatmul.mubr.f32.gmra.mxu0 %v384
  %v528 = vpop.f32.mrf.mxu0
  %v529 = vadd.f32 %v375, %v528
  %v530 = vpop.f32.mrf.mxu0
  %531 = vmatprep.mubr.f32.mxu0 0.0
  %532 = vmatmul.mubr.f32.gmra.mxu0 %v387
  %v533 = vpop.f32.mrf.mxu0
  %v534 = vadd.f32 %v375, %v533
  %v535 = vpop.f32.mrf.mxu0
  %536 = vmatprep.mubr.f32.mxu0 0.0
  %537 = vmatmul.mubr.f32.gmra.mxu0 %v390
  %v538 = vpop.f32.mrf.mxu0
  %v539 = vadd.f32 %v375, %v538
  %v540 = vpop.f32.mrf.mxu0
  %541 = vmatprep.mubr.f32.mxu0 0.0
  %542 = vmatmul.mubr.f32.gmra.mxu0 %v393
  %v543 = vpop.f32.mrf.mxu0
  %v544 = vadd.f32 %v375, %v543
  %v545 = vpop.f32.mrf.mxu0
  %546 = vmatprep.mubr.f32.mxu0 0.0
  %547 = vmatmul.mubr.f32.gmra.mxu0 %v396
  %v548 = vpop.f32.mrf.mxu0
  %v549 = vadd.f32 %v375, %v548
  %v550 = vpop.f32.mrf.mxu0
  %551 = vmatprep.mubr.f32.mxu0 0.0
  %552 = vmatmul.mubr.f32.gmra.mxu0 %v399
  %v553 = vpop.f32.mrf.mxu0
  %v554 = vadd.f32 %v375, %v553
  %v555 = vpop.f32.mrf.mxu0
  %556 = vmatprep.mubr.f32.mxu0 0.0
  %557 = vmatmul.mubr.f32.gmra.mxu0 %v402
  %v558 = vpop.f32.mrf.mxu0
  %v559 = vadd.f32 %v375, %v558
  %v560 = vpop.f32.mrf.mxu0
  %561 = vmatprep.mubr.f32.mxu0 0.0
  %562 = vmatmul.mubr.f32.gmra.mxu0 %v405
  %v563 = vpop.f32.mrf.mxu0
  %v564 = vadd.f32 %v375, %v563
  %v565 = vpop.f32.mrf.mxu0
  %566 = vmatprep.mubr.f32.mxu0 0.0
  %567 = vmatmul.mubr.f32.gmra.mxu0 %v408
  %v568 = vpop.f32.mrf.mxu0
  %v569 = vadd.f32 %v375, %v568
  %v570 = vpop.f32.mrf.mxu0
  %571 = vmatprep.mubr.f32.mxu0 0.0
  %572 = vmatmul.mubr.f32.gmra.mxu0 %v411
  %v573 = vpop.f32.mrf.mxu0
  %v574 = vadd.f32 %v375, %v573
  %v575 = vpop.f32.mrf.mxu0
  %576 = vmatprep.mubr.f32.mxu0 0.0
  %577 = vmatmul.mubr.f32.gmra.mxu0 %v414
  %v578 = vpop.f32.mrf.mxu0
  %v579 = vadd.f32 %v375, %v578
  %v580 = vpop.f32.mrf.mxu0
  %581 = vmatprep.mubr.f32.mxu0 0.0
  %582 = vmatmul.mubr.f32.gmra.mxu0 %v417
  %v583 = vpop.f32.mrf.mxu0
  %v584 = vadd.f32 %v375, %v583
  %v585 = vpop.f32.mrf.mxu0
  %586 = vmatprep.mubr.f32.mxu0 0.0
  %587 = vmatmul.mubr.f32.gmra.mxu0 %v420
  %v588 = vpop.f32.mrf.mxu0
  %v589 = vadd.f32 %v375, %v588
  %v590 = vpop.f32.mrf.mxu0
  %591 = vmatprep.mubr.f32.mxu0 0.0
  %592 = vmatmul.mubr.f32.gmra.mxu0 %v423
  %v593 = vpop.f32.mrf.mxu0
  %v594 = vadd.f32 %v375, %v593
  %v595 = vpop.f32.mrf.mxu0
  %596 = vmatprep.mubr.f32.mxu0 0.0
  %597 = vmatmul.mubr.f32.gmra.mxu0 %v426
  %v598 = vpop.f32.mrf.mxu0
  %v599 = vadd.f32 %v375, %v598
  %v600 = vpop.f32.mrf.mxu0
  %601 = vmatprep.mubr.f32.mxu0 0.0
  %602 = vmatmul.mubr.f32.gmra.mxu0 %v429
  %v603 = vpop.f32.mrf.mxu0
  %v604 = vadd.f32 %v375, %v603
  %v605 = vpop.f32.mrf.mxu0
  %606 = vmatprep.mubr.f32.mxu0 0.0
  %607 = vmatmul.mubr.f32.gmra.mxu0 %v432
  %v608 = vpop.f32.mrf.mxu0
  %v609 = vadd.f32 %v375, %v608
  %v610 = vpop.f32.mrf.mxu0
  %611 = vmatprep.mubr.f32.mxu0 0.0
  %612 = vmatmul.mubr.f32.gmra.mxu0 %v435
  %v613 = vpop.f32.mrf.mxu0
  %v614 = vadd.f32 %v375, %v613
  %v615 = vpop.f32.mrf.mxu0
  %616 = vmatprep.mubr.f32.mxu0 0.0
  %617 = vmatmul.mubr.f32.gmra.mxu0 %v438
  %v618 = vpop.f32.mrf.mxu0
  %v619 = vadd.f32 %v375, %v618
  %v620 = vpop.f32.mrf.mxu0
  %621 = vmatprep.mubr.f32.mxu0 0.0
  %622 = vmatmul.mubr.f32.gmra.mxu0 %v441
  %v623 = vpop.f32.mrf.mxu0
  %v624 = vadd.f32 %v375, %v623
  %v625 = vpop.f32.mrf.mxu0
  %626 = vmatprep.mubr.f32.mxu0 0.0
  %627 = vmatmul.mubr.f32.gmra.mxu0 %v444
  %v628 = vpop.f32.mrf.mxu0
  %v629 = vadd.f32 %v375, %v628
  %v630 = vpop.f32.mrf.mxu0
  %631 = vmatprep.mubr.f32.mxu0 0.0
  %632 = vmatmul.mubr.f32.gmra.mxu0 %v447
  %v633 = vpop.f32.mrf.mxu0
  %v634 = vadd.f32 %v375, %v633
  %v635 = vpop.f32.mrf.mxu0
  %636 = vmatprep.mubr.f32.mxu0 0.0
  %637 = vmatmul.mubr.f32.gmra.mxu0 %v450
  %v638 = vpop.f32.mrf.mxu0
  %v639 = vadd.f32 %v375, %v638
  %v640 = vpop.f32.mrf.mxu0
  %641 = vdwg.mxu0
  %642 = vst.msk [vmem:[%s3] sm:$0xff] %vm39, %v519
  %643 = vst.msk [vmem:[%s3 + $0x8] sm:$0xff] %vm39, %v524
  %644 = vst.msk [vmem:[%s3 + $0x10] sm:$0xff] %vm39, %v529
  %645 = vst.msk [vmem:[%s3 + $0x18] sm:$0xff] %vm39, %v534
  %646 = vst.msk [vmem:[%s3 + $0x20] sm:$0xff] %vm39, %v539
  %647 = vst.msk [vmem:[%s3 + $0x28] sm:$0xff] %vm39, %v544
  %648 = vst.msk [vmem:[%s3 + $0x30] sm:$0xff] %vm39, %v549
  %649 = vst.msk [vmem:[%s3 + $0x38] sm:$0xff] %vm39, %v554
  %650 = vst.msk [vmem:[%s3 + $0x40] sm:$0xff] %vm39, %v559
  %651 = vst.msk [vmem:[%s3 + $0x48] sm:$0xff] %vm39, %v564
  %652 = vst.msk [vmem:[%s3 + $0x50] sm:$0xff] %vm39, %v569
  %653 = vst.msk [vmem:[%s3 + $0x58] sm:$0xff] %vm39, %v574
  %654 = vst.msk [vmem:[%s3 + $0x60] sm:$0xff] %vm39, %v579
  %655 = vst.msk [vmem:[%s3 + $0x68] sm:$0xff] %vm39, %v584
  %656 = vst.msk [vmem:[%s3 + $0x70] sm:$0xff] %vm39, %v589
  %657 = vst.msk [vmem:[%s3 + $0x78] sm:$0xff] %vm39, %v594
  %658 = vst.msk [vmem:[%s3 + $0x80] sm:$0xff] %vm39, %v599
  %659 = vst.msk [vmem:[%s3 + $0x88] sm:$0xff] %vm39, %v604
  %660 = vst.msk [vmem:[%s3 + $0x90] sm:$0xff] %vm39, %v609
  %661 = vst.msk [vmem:[%s3 + $0x98] sm:$0xff] %vm39, %v614
  %662 = vst.msk [vmem:[%s3 + $0xa0] sm:$0xff] %vm39, %v619
  %663 = vst.msk [vmem:[%s3 + $0xa8] sm:$0xff] %vm39, %v624
  %664 = vst.msk [vmem:[%s3 + $0xb0] sm:$0xff] %vm39, %v629
  %665 = vst.msk [vmem:[%s3 + $0xb8] sm:$0xff] %vm39, %v634
  %666 = vst.msk [vmem:[%s3 + $0xc0] sm:$0xff] %vm39, %v639
  // Predicated region
  $region14: #{tpu_custom_call.1} parent=0 // pred_check
    _
  $region15: #{tpu_custom_call.1} parent=0 // pred_check_branch
    %668 = sbr.rel (0) target = $region17
  $region16: #{tpu_custom_call.1} parent=0 // pred_region
    _
  $region17: #{tpu_custom_call.1} parent=0 // pred_fallthru
    _
  // Predicated region
  $region18: #{tpu_custom_call.1} parent=0 // pred_check
    _
  $region19: #{tpu_custom_call.1} parent=0 // pred_check_branch
    %670 = sbr.rel (0) target = $region21
  $region20: #{tpu_custom_call.1} parent=0 // pred_region
    _
  $region21: #{tpu_custom_call.1} parent=0 // pred_fallthru
    _

</llo_original>
